<compile_context>
chip_gen: v6e
topology: v6e:2x2x1
jax: 0.10.0
libtpu: 0.0.40
codegen_flags: <defaults>
</compile_context>

<pallas_src>
import jax
import jax.numpy as jnp
from jax.experimental import pallas as pl
from jax.experimental.pallas import tpu as pltpu


# ----------------------------------------------------------------------------
# Constant buffer (mirrors register_buffer in __init__, including the module's
# exact (non-negated-exponent) formula).
# ----------------------------------------------------------------------------
def build_pe_table(seq_len: int, d_model: int) -> jax.Array:
    assert d_model % 2 == 0, "d_model must be even (as in the PyTorch module)"
    position = jnp.arange(seq_len, dtype=jnp.float32)[:, None]                # (S, 1)
    # NOTE: faithful to the reference, which multiplies by 10000**(+2i/d)
    # (it omits the usual minus sign); flagged upstream, not "fixed" here.
    denominator = jnp.power(
        jnp.float32(10000.0),
        2.0 * jnp.arange(0, d_model, 2, dtype=jnp.float32) / float(d_model))  # (D/2,)
    angles = position * denominator                                           # (S, D/2)
    pe = jnp.zeros((seq_len, d_model), jnp.float32)
    pe = pe.at[:, 0::2].set(jnp.sin(angles))
    pe = pe.at[:, 1::2].set(jnp.cos(angles))
    return pe


# ----------------------------------------------------------------------------
# Kernels (pure VPU elementwise; HBM-bound)
# ----------------------------------------------------------------------------
def _pe_add_kernel(x_ref, pe_ref, out_ref):
    # x_ref: (TB, TC); pe_ref: (1, TC) broadcast over sublanes.
    out_ref[...] = x_ref[...] + pe_ref[...]


def _pe_add_dropout_kernel(x_ref, pe_ref, mask_ref, out_ref):
    # mask holds 0.0 (dropped) or 1/(1-p) (kept): scale is fused into the mask.
    out_ref[...] = (x_ref[...] + pe_ref[...]) * mask_ref[...]


# ----------------------------------------------------------------------------
# Tiling
# ----------------------------------------------------------------------------
_SUBLANE = 8
_MAX_LANE_TILE = 16384            # 128-aligned lane-tile cap (64 KiB f32 per row)
_BLOCK_BYTES = 4 << 20            # ~4 MiB of x per grid step
_VMEM_LIMIT_BYTES = 48 * 1024 * 1024


def _choose_tiles(batch: int, n: int, itemsize: int):
    """Pick (row_tile, col_tile) so one x block is ~_BLOCK_BYTES.

    col_tile is the whole row (any size) or a 128-aligned cap; row_tile is the
    whole batch or a multiple of 8.  Ragged edges are handled by a cdiv grid,
    so no fallback can ever make a block larger than the budget.
    """
    tc = n if n <= _MAX_LANE_TILE else _MAX_LANE_TILE
    rows_budget = max(_SUBLANE, _BLOCK_BYTES // (tc * itemsize))
    if batch <= rows_budget:
        tb = batch
    else:
        tb = (rows_budget // _SUBLANE) * _SUBLANE
    return tb, tc


# ----------------------------------------------------------------------------
# Dropout mask helper (exactly what the kernel multiplies by)
# ----------------------------------------------------------------------------
def dropout_mask(key, shape, rate: float, dtype):
    keep = jax.random.bernoulli(key, 1.0 - rate, shape)
    return keep.astype(dtype) * jnp.asarray(1.0 / (1.0 - rate), dtype)


# ----------------------------------------------------------------------------
# Wrapper
# ----------------------------------------------------------------------------
def positional_encoding(x, pe, *, dropout_rate: float = 0.0, rng_key=None,
                        donate_x: bool = False):
    """Forward pass of PositionalEncoding.

    x  : (B, S, D) float32
    pe : (seq_len, D) float32 constant buffer, seq_len >= S
    dropout_rate == 0.0 -> eval mode (exact); > 0 -> inverted dropout using a
    mask drawn from `rng_key` (jax.random stream, not torch's).
    donate_x=True aliases x's buffer to the output (caller must donate x).
    """
    B, S, D = x.shape
    assert pe.shape[0] >= S and pe.shape[1] == D, "pe buffer too small"
    training = dropout_rate > 0.0
    if training:
        assert 0.0 < dropout_rate < 1.0
        assert rng_key is not None, "rng_key required when dropout_rate > 0"

    N = S * D
    x2 = x.reshape(B, N)            # lane-dense last dim
    pe2 = pe[:S].reshape(1, N)      # pe[:, :x.shape[1], :]

    itemsize = jnp.dtype(x.dtype).itemsize
    tb, tc = _choose_tiles(B, N, itemsize)
    # Columns OUTER, rows INNER -> the pe block index is constant over the
    # inner row loop, so its DMA is not re-issued.
    grid = (pl.cdiv(N, tc), pl.cdiv(B, tb))

    x_spec = pl.BlockSpec((tb, tc), lambda j, i: (i, j))
    pe_spec = pl.BlockSpec((1, tc), lambda j, i: (0, j))
    out_spec = pl.BlockSpec((tb, tc), lambda j, i: (i, j))

    compiler_params = pltpu.CompilerParams(
        dimension_semantics=("parallel", "parallel"),
        vmem_limit_bytes=_VMEM_LIMIT_BYTES)

    mask_bytes = B * N * itemsize if training else 0
    cost = pl.CostEstimate(
        flops=(2 if training else 1) * B * N,
        transcendentals=0,
        bytes_accessed=2 * B * N * itemsize + N * itemsize + mask_bytes)

    io_aliases = {0: 0} if donate_x else {}

    if training:
        mask = dropout_mask(rng_key, (B, N), float(dropout_rate), x.dtype)
        out2 = pl.pallas_call(
            _pe_add_dropout_kernel,
            out_shape=jax.ShapeDtypeStruct((B, N), x.dtype),
            grid=grid,
            in_specs=[x_spec, pe_spec, x_spec],
            out_specs=out_spec,
            compiler_params=compiler_params,
            cost_estimate=cost,
            input_output_aliases=io_aliases,
        )(x2, pe2, mask)
    else:
        out2 = pl.pallas_call(
            _pe_add_kernel,
            out_shape=jax.ShapeDtypeStruct((B, N), x.dtype),
            grid=grid,
            in_specs=[x_spec, pe_spec],
            out_specs=out_spec,
            compiler_params=compiler_params,
            cost_estimate=cost,
            input_output_aliases=io_aliases,
        )(x2, pe2)

    return out2.reshape(B, S, D)


# ----------------------------------------------------------------------------
# Test
# ----------------------------------------------------------------------------
if __name__ == "__main__":
    # Small shapes consistent with the module: batch=2, seq_len=8, d_model=32.
    B, S, D = 2, 8, 32
    MAX_SEQ_LEN = 16                # buffer length >= runtime sequence length

    key = jax.random.PRNGKey(0)
    x_key, drop_key = jax.random.split(key)
    x = jax.random.normal(x_key, (B, S, D), jnp.float32)

    pe = build_pe_table(MAX_SEQ_LEN, D)            # the registered buffer
    ref = x + pe[None, :S, :]

    # --- eval-mode forward (dropout inactive): exact check vs reference -----
    out = jax.block_until_ready(positional_encoding(x, pe, dropout_rate=0.0))
    assert out.shape == (B, S, D)
    assert bool(jnp.all(jnp.isfinite(out)))
    max_err = float(jnp.max(jnp.abs(out - ref)))
    assert jnp.allclose(out, ref, atol=1e-6, rtol=1e-6), max_err

    # --- training-mode forward (inverted dropout) ----------------------------
    # TODO(synk): the dropout mask comes from jax.random, so the kept/dropped
    #             pattern differs from torch.nn.Dropout's RNG stream.
    p = 0.5
    out_d = jax.block_until_ready(
        positional_encoding(x, pe, dropout_rate=p, rng_key=drop_key))
    mask_ref = dropout_mask(drop_key, (B, S * D), p, x.dtype).reshape(B, S, D)
    expected = ref * mask_ref
    assert bool(jnp.all(jnp.isfinite(out_d)))
    assert jnp.allclose(out_d, expected, atol=1e-6, rtol=1e-6), \
        float(jnp.max(jnp.abs(out_d - expected)))
    frac_kept = float(jnp.mean((mask_ref != 0.0).astype(jnp.float32)))
    assert 0.25 < frac_kept < 0.75, frac_kept

    print("KERNEL_OK")
</pallas_src>

<mosaic_0001>
module attributes {stable_mosaic.version = 11 : i64} {
  func.func @_pe_add_kernel(%arg0: i32, %arg1: i32, %arg2: memref<2x256xf32, #tpu.memory_space<vmem>>, %arg3: memref<1x256xf32, #tpu.memory_space<vmem>>, %arg4: memref<2x256xf32, #tpu.memory_space<vmem>>) attributes {dimension_semantics = [#tpu.dimension_semantics<parallel>, #tpu.dimension_semantics<parallel>], iteration_bounds = array<i64: 1, 1>, scalar_prefetch = 0 : i64, scratch_operands = 0 : i64, tpu.core_type = #tpu.core_type<tc>, window_params = [{transform_indices = @transform_0, window_bounds = array<i64: 2, 256>}, {transform_indices = @transform_1, window_bounds = array<i64: 1, 256>}, {transform_indices = @transform_2, window_bounds = array<i64: 2, 256>}]} {
    %c0 = arith.constant 0 : index
    %c0_0 = arith.constant 0 : index
    %0 = vector.load %arg2[%c0, %c0_0] : memref<2x256xf32, #tpu.memory_space<vmem>>, vector<2x256xf32>
    %c0_1 = arith.constant 0 : index
    %c0_2 = arith.constant 0 : index
    %1 = vector.load %arg3[%c0_1, %c0_2] : memref<1x256xf32, #tpu.memory_space<vmem>>, vector<1x256xf32>
    %2 = vector.broadcast %1 : vector<1x256xf32> to vector<2x256xf32>
    %3 = arith.addf %0, %2 : vector<2x256xf32>
    %c0_3 = arith.constant 0 : index
    %c0_4 = arith.constant 0 : index
    %4 = vector.load %arg4[%c0_3, %c0_4] : memref<2x256xf32, #tpu.memory_space<vmem>>, vector<2x256xf32>
    tpu.vector_store %arg4[%c0_3, %c0_4], %3 {strides = array<i32>} : memref<2x256xf32, #tpu.memory_space<vmem>>, vector<2x256xf32>,
    return
  }
  func.func @transform_0(%arg0: i32, %arg1: i32) -> (i32, i32) {
    %c0_i32 = arith.constant 0 : i32
    return %arg1, %arg0 : i32, i32
  }
  func.func @transform_1(%arg0: i32, %arg1: i32) -> (i32, i32) {
    %c0_i32 = arith.constant 0 : i32
    %c0_i32_0 = arith.constant 0 : i32
    return %c0_i32, %arg0 : i32, i32
  }
  func.func @transform_2(%arg0: i32, %arg1: i32) -> (i32, i32) {
    %c0_i32 = arith.constant 0 : i32
    return %arg1, %arg0 : i32, i32
  }
}

</mosaic_0001>

<llo_original>
// kernel: tpu_custom_call.1
$region0: #{tpu_custom_call.1}
  #allocation0 [shape = 'u32[]', space=smem, size = 0x4, offset = 0x4, fixed_abs, tag = 'smem constant byte address 0x4 - core index']
  #allocation1 [shape = 'u32[144,128]{1,0:T(1,128)}', space=vmem, size = 0x12000, scoped, tag = 'internal scratch']
  %s0 = inlined_call_operand.hbm [shape: f32[2,256], index: 0, kind: input, shape index: {}]
  %s1 = inlined_call_operand.hbm [shape: f32[1,256], index: 1, kind: input, shape index: {}]
  %s2 = inlined_call_operand.hbm [shape: f32[2,256], index: 2, kind: output, shape index: {}]
  %s3 = sld [smem:[#allocation0]]
  $region26: #{tpu_custom_call.1} parent=0
    _
  %s5 = ssub.s32 1, %s3
  %s6 = scalar_select 0, %s5, %s3
  $region1: #{tpu_custom_call.1} parent=0
    #allocation2 [shape = 'u8[2048]{0}', space=vmem, size = 0x800, scoped, tag = 'input window, operand 0, single buffered']
    #allocation3 [shape = 's32[1]{0}', space=sflag, size = 0x4, scoped, tag = 'scoped memory for tpu_custom_call.1']
    #allocation4 [shape = 's32[1]{0}', space=sflag, size = 0x4, scoped, tag = 'scoped memory for tpu_custom_call.1']
    #allocation5 [shape = 'u8[1024]{0}', space=vmem, size = 0x400, scoped, tag = 'input window, operand 1, single buffered']
    #allocation6 [shape = 's32[1]{0}', space=sflag, size = 0x4, scoped, tag = 'scoped memory for tpu_custom_call.1']
    #allocation7 [shape = 'u8[2048]{0}', space=vmem, size = 0x800, scoped, tag = 'output window, operand 0, single buffered']
    %7 = vsyncpa [#allocation3], 0
    %8 = vsyncpa [#allocation6], 0
    %9 = vsyncpa [#allocation4], 0
    // Predicated region
    $region2: #{tpu_custom_call.1} parent=1 // pred_check
      _
    $region3: #{tpu_custom_call.1} parent=1 // pred_check_branch
      %11 = sbr.rel (0) target = $region5
    $region4: #{tpu_custom_call.1} parent=1 // pred_region
      %s13 = ssub.s32 64, 64
      %14 = vsyncadd [#allocation3], %s13
      %s16 = sshll.u32 [#allocation2], 4
      %s17 = int_to_ptr.vmem [resolvable:$true] %s16
      %19 = dma.hbm_to_vmem [thread:$0]  %s0, 64, %s17, [#allocation3]
    $region5: #{tpu_custom_call.1} parent=1 // pred_fallthru
      _
    // Predicated region
    $region6: #{tpu_custom_call.1} parent=1 // pred_check
      _
    $region7: #{tpu_custom_call.1} parent=1 // pred_check_branch
      %21 = sbr.rel (0) target = $region9
    $region8: #{tpu_custom_call.1} parent=1 // pred_region
      %s23 = ssub.s32 32, 32
      %24 = vsyncadd [#allocation6], %s23
      %s26 = sshll.u32 [#allocation5], 4
      %s27 = int_to_ptr.vmem [resolvable:$true] %s26
      %29 = dma.hbm_to_vmem [thread:$0]  %s1, 32, %s27, [#allocation6]
    $region9: #{tpu_custom_call.1} parent=1 // pred_fallthru
      _
    // Predicated region
    $region10: #{tpu_custom_call.1} parent=1 // pred_check
      _
    $region11: #{tpu_custom_call.1} parent=1 // pred_check_branch
      %31 = sbr.rel (0) target = $region13
    $region12: #{tpu_custom_call.1} parent=1 // pred_region
      %32 = dma.done [#allocation3], 64
    $region13: #{tpu_custom_call.1} parent=1 // pred_fallthru
      _
    // Predicated region
    $region14: #{tpu_custom_call.1} parent=1 // pred_check
      _
    $region15: #{tpu_custom_call.1} parent=1 // pred_check_branch
      %34 = sbr.rel (0) target = $region17
    $region16: #{tpu_custom_call.1} parent=1 // pred_region
      %35 = dma.done [#allocation6], 32
    $region17: #{tpu_custom_call.1} parent=1 // pred_fallthru
      _
    %v36 = vld [vmem:[#allocation2] sm:$0xf]
    %v37 = vld [vmem:[#allocation5] sm:$0x3]
    %v39 = vlaneseq
    %v40 = vshrl.u32 %v39, 7
    %v41 = vsub.s32 0, %v40
    %v42 = vrot.slane %v37, %v41
    %v43 = vlaneseq
    %v44 = vshrl.u32 %v43, 7
    %v45 = vsub.s32 1, %v44
    %v46 = vrot.slane %v37, %v45
    %v47 = vcombine.low %v42, %v46
    %v49 = vunpack.c.l.s4 1983009808
    %v50 = vunpack.c.0.s8 %v49
    %v51 = vlaneseq
    %v52 = vshrl.u32 %v51, 7
    %v53 = vsub.s32 %v50, %v52
    %v54 = vrot.slane %v47, %v53
    %v56 = vadd.f32 %v36, %v54
    %57 = vst [vmem:[#allocation7] sm:$0xf] %v56
    // Predicated region
    $region18: #{tpu_custom_call.1} parent=1 // pred_check
      _
    $region19: #{tpu_custom_call.1} parent=1 // pred_check_branch
      %59 = sbr.rel (0) target = $region21
    $region20: #{tpu_custom_call.1} parent=1 // pred_region
      %s61 = ssub.s32 64, 64
      %62 = vsyncadd [#allocation4], %s61
      %s64 = sshll.u32 [#allocation7], 4
      %s65 = int_to_ptr.vmem [resolvable:$true] %s64
      %67 = dma.vmem_to_hbm [thread:$0]  %s65, 64, %s2, [#allocation4]
    $region21: #{tpu_custom_call.1} parent=1 // pred_fallthru
      _
    // Predicated region
    $region22: #{tpu_custom_call.1} parent=1 // pred_check
      _
    $region23: #{tpu_custom_call.1} parent=1 // pred_check_branch
      %69 = sbr.rel (0) target = $region25
    $region24: #{tpu_custom_call.1} parent=1 // pred_region
      %70 = dma.done [#allocation4], 64
    $region25: #{tpu_custom_call.1} parent=1 // pred_fallthru
      _
    %71 = vsyncpa [#allocation3], 1
    %72 = vsyncpa [#allocation6], 1
    %73 = vsyncpa [#allocation4], 1

</llo_original>
